<compile_context>
chip_gen: v7x
topology: tpu7x:2x2x1
jax: 0.10.0
libtpu: 0.0.40
codegen_flags: <defaults>
</compile_context>

<pallas_src>
import jax
import jax.numpy as jnp
from jax.experimental import pallas as pl
from jax.experimental.pallas import tpu as pltpu


def _round_up(a: int, b: int) -> int:
    return (a + b - 1) // b * b


def _vmem_limit_bytes() -> int:
    """Generation-aware scoped-VMEM limit: ~half of physical VMEM, capped at 64 MiB."""
    cap = None
    try:
        info = pltpu.get_tpu_info()
        cap = getattr(info, "vmem_capacity_bytes", None)
    except Exception:
        cap = None
    if not cap or cap <= 0:
        cap = 64 * 1024 * 1024  # assume the smallest (v7x per-core) if unknown
    return int(min(64 * 1024 * 1024, cap // 2))


def _fold_lane_groups(xf, width):
    """Fold full 128-lane groups of xf[:, :width] (width a multiple of 128) via VPU adds."""
    folded = xf[:, 0:128]
    for g in range(1, width // 128):
        folded = folded + xf[:, g * 128:(g + 1) * 128]
    return folded


def _make_single_chunk_kernel(S: int, inv_s: float):
    """Whole spatial extent in one chunk (TS == S): no accumulator scratch needed."""
    G = S // 128
    T = S % 128

    def kernel(x_ref, o_ref):
        xf = x_ref[...].astype(jnp.float32)  # accumulate in f32 regardless of input dtype
        if G >= 1:
            folded = _fold_lane_groups(xf[:, :G * 128], G * 128)
            row = jnp.sum(folded, axis=-1, keepdims=True)
            if T:
                row = row + jnp.sum(xf[:, G * 128:], axis=-1, keepdims=True)
        else:
            row = jnp.sum(xf, axis=-1, keepdims=True)
        o_ref[...] = (row * inv_s).astype(o_ref.dtype)

    return kernel


def _make_multi_chunk_kernel(S: int, TS: int, inv_s: float, needs_mask: bool):
    """Spatial extent split into multiple-of-128 chunks; lane-dense (TR,128) f32 accumulator."""

    def accum(x_ref, acc_ref, k, mask_cols: bool):
        xf = x_ref[...].astype(jnp.float32)
        if mask_cols:
            col = k * TS + jax.lax.broadcasted_iota(jnp.int32, xf.shape, 1)
            xf = jnp.where(col < S, xf, 0.0)
        acc_ref[...] += _fold_lane_groups(xf, TS)  # VPU-only folding; no per-step XLU reduce

    def kernel(x_ref, o_ref, acc_ref):
        k = pl.program_id(1)
        nk = pl.num_programs(1)

        @pl.when(k == 0)
        def _init():
            acc_ref[...] = jnp.zeros_like(acc_ref)

        if needs_mask:
            # Only the final chunk hangs past the array edge; full chunks stay mask-free.
            @pl.when(k < nk - 1)
            def _full():
                accum(x_ref, acc_ref, k, mask_cols=False)

            @pl.when(k == nk - 1)
            def _partial():
                accum(x_ref, acc_ref, k, mask_cols=True)
        else:
            accum(x_ref, acc_ref, k, mask_cols=False)

        @pl.when(k == nk - 1)
        def _finalize():
            row = jnp.sum(acc_ref[...], axis=-1, keepdims=True)  # one XLU reduce per row tile
            o_ref[...] = (row * inv_s).astype(o_ref.dtype)

    return kernel


def global_avg_pool2d(x, *, max_col_tile: int = 4096, max_row_tile: int = 8192,
                      target_block_bytes: int = 8 * 1024 * 1024):
    """x: (N, C, H, W) -> (N, C) = mean over spatial dims (same as adaptive_avg_pool2d(x, 1))."""
    N, C, H, W = x.shape
    S = H * W
    R = N * C
    x2 = x.reshape(R, S)  # contiguous reshape: rows = (n, c) pairs, cols = spatial positions

    itemsize = jnp.dtype(x.dtype).itemsize
    max_col_tile = max(128, (max_col_tile // 128) * 128)

    # Lane (reduction) tile: full spatial extent if it fits (single chunk, no mask),
    # otherwise multiple-of-128 chunks with only the ragged last chunk masked in-kernel.
    if S <= max_col_tile:
        TS = S
        multi_chunk = False
        needs_mask = False
    else:
        TS = max_col_tile
        multi_chunk = True
        needs_mask = (S % TS) != 0
    num_k = pl.cdiv(S, TS)

    # Row (sublane) tile: ~target_block_bytes of input per step, within the VMEM budget
    # (double-buffered input + lane-padded output + f32 accumulator).
    ts_pad = _round_up(TS, 128)
    vmem_limit = _vmem_limit_bytes()
    budget = max(4 * 1024 * 1024, vmem_limit - 2 * 1024 * 1024)
    per_row_bytes = (2 * ts_pad * itemsize          # double-buffered input block
                     + 2 * 128 * itemsize           # double-buffered (TR,1) output (lane-padded)
                     + (128 * 4 if multi_chunk else 0))  # f32 accumulator scratch
    rows_target = target_block_bytes // max(1, ts_pad * itemsize)
    rows_vmem = budget // per_row_bytes
    TR_cap = min(rows_target, rows_vmem, max_row_tile)
    TR_cap = max(8, (TR_cap // 8) * 8)

    if TR_cap >= R:
        if R >= 16:
            # Split rows so the parallel axis has >= 2 steps (keeps the 2nd v7x TensorCore
            # busy); costs only one extra ~0.35 us grid step on single-TC chips.
            TR = _round_up((R + 1) // 2, 8)
        else:
            TR = R  # full array dim: always a legal block size
    else:
        TR = TR_cap

    grid = (pl.cdiv(R, TR), num_k)  # reduction axis last, marked "arbitrary"

    inv_s = 1.0 / float(S)
    if multi_chunk:
        kernel = _make_multi_chunk_kernel(S, TS, inv_s, needs_mask)
        scratch = [pltpu.VMEM((TR, 128), jnp.float32)]
    else:
        kernel = _make_single_chunk_kernel(S, inv_s)
        scratch = []

    cost = pl.CostEstimate(
        flops=R * S,
        transcendentals=0,
        bytes_accessed=R * S * itemsize + R * itemsize,
    )

    out = pl.pallas_call(
        kernel,
        out_shape=jax.ShapeDtypeStruct((R, 1), x.dtype),
        grid_spec=pltpu.PrefetchScalarGridSpec(
            num_scalar_prefetch=0,
            grid=grid,
            in_specs=[pl.BlockSpec((TR, TS), lambda i, k: (i, k))],
            out_specs=pl.BlockSpec((TR, 1), lambda i, k: (i, 0)),
            scratch_shapes=scratch,
        ),
        compiler_params=pltpu.CompilerParams(
            dimension_semantics=("parallel", "arbitrary"),
            vmem_limit_bytes=vmem_limit,
        ),
        cost_estimate=cost,
    )(x2)
    return out.reshape(N, C)


if __name__ == "__main__":
    key = jax.random.PRNGKey(0)
    k1, k2 = jax.random.split(key)

    # Primary check: small spec-scale shape (single-chunk path, multiple-of-128 spatial).
    N, C, H, W = 2, 4, 16, 16
    x = jax.random.normal(k1, (N, C, H, W), dtype=jnp.float32)
    y = global_avg_pool2d(x)
    jax.block_until_ready(y)
    y_ref = jnp.mean(x, axis=(2, 3))
    assert y.shape == (N, C)
    assert jnp.allclose(y, y_ref, atol=1e-5, rtol=1e-5)

    # Secondary check: bf16 input with f32 accumulation, non-multiple-of-8 row count,
    # larger single-chunk spatial extent (48*48 = 2304 lanes = 18 lane groups).
    x2 = jax.random.normal(k2, (2, 3, 48, 48), dtype=jnp.bfloat16)
    y2 = global_avg_pool2d(x2)
    jax.block_until_ready(y2)
    y2_ref = jnp.mean(x2.astype(jnp.float32), axis=(2, 3))
    assert y2.shape == (2, 3)
    assert jnp.allclose(y2.astype(jnp.float32), y2_ref, atol=1e-3, rtol=2e-2)

    # Third check: multi-chunk accumulator path with ragged last chunk
    # (S = 72*72 = 5184 > 4096 column tile).
    x3 = jax.random.normal(k1, (2, 5, 72, 72), dtype=jnp.float32)
    y3 = global_avg_pool2d(x3)
    jax.block_until_ready(y3)
    y3_ref = jnp.mean(x3, axis=(2, 3))
    assert y3.shape == (2, 5)
    assert jnp.allclose(y3, y3_ref, atol=1e-4, rtol=1e-5)

    print("KERNEL_OK")
</pallas_src>

<mosaic_0001>
module attributes {stable_mosaic.version = 11 : i64} {
  func.func @kernel(%arg0: i32, %arg1: i32, %arg2: memref<8x256xf32, #tpu.memory_space<vmem>>, %arg3: memref<8x1xf32, #tpu.memory_space<vmem>>) attributes {dimension_semantics = [#tpu.dimension_semantics<parallel>, #tpu.dimension_semantics<arbitrary>], iteration_bounds = array<i64: 1, 1>, scalar_prefetch = 0 : i64, scratch_operands = 0 : i64, tpu.core_type = #tpu.core_type<tc>, window_params = [{transform_indices = @transform_0, window_bounds = array<i64: 8, 256>}, {transform_indices = @transform_1, window_bounds = array<i64: 8, 1>}]} {
    %c0 = arith.constant 0 : index
    %c0_0 = arith.constant 0 : index
    %0 = vector.load %arg2[%c0, %c0_0] : memref<8x256xf32, #tpu.memory_space<vmem>>, vector<8x256xf32>
    %1 = vector.extract_strided_slice %0 {offsets = [0, 0], sizes = [8, 128], strides = [1, 1]} : vector<8x256xf32> to vector<8x128xf32>
    %2 = vector.extract_strided_slice %0 {offsets = [0, 128], sizes = [8, 128], strides = [1, 1]} : vector<8x256xf32> to vector<8x128xf32>
    %3 = arith.addf %1, %2 : vector<8x128xf32>
    %cst = arith.constant dense<0.000000e+00> : vector<8xf32>
    %4 = vector.multi_reduction <add>, %3, %cst [1] : vector<8x128xf32> to vector<8xf32>
    %5 = vector.shape_cast %4 : vector<8xf32> to vector<8x1xf32>
    %cst_1 = arith.constant 3.906250e-03 : f32
    %6 = vector.broadcast %cst_1 : f32 to vector<8x1xf32>
    %7 = arith.mulf %5, %6 : vector<8x1xf32>
    %c0_2 = arith.constant 0 : index
    %c0_3 = arith.constant 0 : index
    %8 = vector.load %arg3[%c0_2, %c0_3] : memref<8x1xf32, #tpu.memory_space<vmem>>, vector<8x1xf32>
    tpu.vector_store %arg3[%c0_2, %c0_3], %7 {strides = array<i32>} : memref<8x1xf32, #tpu.memory_space<vmem>>, vector<8x1xf32>,
    return
  }
  func.func @transform_0(%arg0: i32, %arg1: i32) -> (i32, i32) {
    %c0_i32 = arith.constant 0 : i32
    return %arg0, %arg1 : i32, i32
  }
  func.func @transform_1(%arg0: i32, %arg1: i32) -> (i32, i32) {
    %c0_i32 = arith.constant 0 : i32
    %c0_i32_0 = arith.constant 0 : i32
    return %arg0, %c0_i32 : i32, i32
  }
}

</mosaic_0001>

<llo_original>
// kernel: tpu_custom_call.1
$region0: #{tpu_custom_call.1}
  #allocation0 [shape = 'u32[]', space=smem, size = 0x4, offset = 0x4, fixed_abs, tag = 'smem constant byte address 0x4 - core index']
  #allocation1 [shape = 'u32[144,128]{1,0:T(1,128)}', space=vmem, size = 0x12000, scoped, tag = 'internal scratch']
  %s0 = inlined_call_operand.hbm [shape: f32[8,256], index: 0, kind: input, shape index: {}]
  %s1 = inlined_call_operand.vmem [shape: f32[8,1], index: 1, kind: output, shape index: {}]
  %s2 = sld [smem:[#allocation0]]
  $region18: #{tpu_custom_call.1} parent=0
    _
  %s4 = ssub.s32 1, %s2
  %s5 = scalar_select 0, %s4, %s2
  $region1: #{tpu_custom_call.1} parent=0
    #allocation2 [shape = 'u8[8192]{0}', space=vmem, size = 0x2000, scoped, tag = 'input window, operand 0, single buffered']
    #allocation3 [shape = 's32[1]{0}', space=sflag, size = 0x4, scoped, tag = 'scoped memory for tpu_custom_call.1']
    %6 = vsyncpa [#allocation3], 0
    // Predicated region
    $region2: #{tpu_custom_call.1} parent=1 // pred_check
      _
    $region3: #{tpu_custom_call.1} parent=1 // pred_check_branch
      %8 = sbr.rel (0) target = $region5
    $region4: #{tpu_custom_call.1} parent=1 // pred_region
      %s10 = ssub.s32 256, 256
      %11 = vsyncadd [#allocation3], %s10
      %s13 = sshll.u32 [#allocation2], 4
      %s14 = int_to_ptr.vmem [resolvable:$true] %s13
      %16 = dma.hbm_to_vmem [thread:$0]  %s0, 256, %s14, [#allocation3]
    $region5: #{tpu_custom_call.1} parent=1 // pred_fallthru
      _
    // Predicated region
    $region6: #{tpu_custom_call.1} parent=1 // pred_check
      _
    $region7: #{tpu_custom_call.1} parent=1 // pred_check_branch
      %18 = sbr.rel (0) target = $region9
    $region8: #{tpu_custom_call.1} parent=1 // pred_region
      %19 = dma.done [#allocation3], 256
    $region9: #{tpu_custom_call.1} parent=1 // pred_fallthru
      _
    %v20 = vld [vmem:[#allocation2] sm:$0xff]
    %v21 = vld [vmem:[#allocation2 + $0x8] sm:$0xff]
    %v22 = vadd.f32 %v20, %v21
    %23 = vadd.xlane.f32.xlu0 %v22
    %v24 = vpop.xlane.xlu0 %23
    %v25 = vmul.f32 %v24, 0.00390625
    %vm26 = vcmask 7168
    %27 = vst.msk [vmem:[%s1] sm:$0xff] %vm26, %v25
    // Predicated region
    $region10: #{tpu_custom_call.1} parent=1 // pred_check
      _
    $region11: #{tpu_custom_call.1} parent=1 // pred_check_branch
      %29 = sbr.rel (0) target = $region13
    $region12: #{tpu_custom_call.1} parent=1 // pred_region
      _
    $region13: #{tpu_custom_call.1} parent=1 // pred_fallthru
      _
    // Predicated region
    $region14: #{tpu_custom_call.1} parent=1 // pred_check
      _
    $region15: #{tpu_custom_call.1} parent=1 // pred_check_branch
      %31 = sbr.rel (0) target = $region17
    $region16: #{tpu_custom_call.1} parent=1 // pred_region
      _
    $region17: #{tpu_custom_call.1} parent=1 // pred_fallthru
      _
    %32 = vsyncpa [#allocation3], 1

</llo_original>
